<compile_context>
chip_gen: v6e
topology: v6e:2x2x1
jax: 0.10.0
libtpu: 0.0.40
codegen_flags: <defaults>
</compile_context>

<pallas_src>
import functools

import jax
import jax.numpy as jnp
from jax.experimental import pallas as pl
from jax.experimental.pallas import tpu as pltpu


def _ce_ls_int_kernel(logits_ref, labels_ref, loss_ref, *, epsilon, num_classes):
    # logits_ref: (TB, K) any float dtype, labels_ref: (TB, 1) int32,
    # loss_ref: (TB, 1) float32.
    x = logits_ref[...].astype(jnp.float32)                       # (TB, K)
    labels = labels_ref[...]                                      # (TB, 1) int32

    # Numerically-stable logsumexp along the class (lane) axis.
    m = jnp.max(x, axis=-1, keepdims=True)                        # (TB, 1)
    lse = jnp.log(jnp.sum(jnp.exp(x - m), axis=-1, keepdims=True)) + m

    # Fused smoothed cross entropy (single weighted reduction):
    #   loss = sum_j ((1-eps)*onehot_j + eps/K) * (lse - x_j)
    #        = lse - sum_j w_j * x_j,   w_j = (1-eps)*[j==label] + eps/K
    class_ids = jax.lax.broadcasted_iota(jnp.int32, x.shape, 1)   # (TB, K)
    base = jnp.float32(epsilon / num_classes)
    hit = jnp.float32(1.0 - epsilon + epsilon / num_classes)
    w = jnp.where(class_ids == labels, hit, base)                 # (TB, K)
    weighted = jnp.sum(w * x, axis=-1, keepdims=True)             # (TB, 1)

    loss_ref[...] = lse - weighted


def _ce_ls_soft_kernel(logits_ref, targets_ref, loss_ref, *, epsilon, num_classes):
    # 2-D (already soft / one-hot) targets path of the PyTorch module.
    x = logits_ref[...].astype(jnp.float32)                       # (TB, K)
    t = targets_ref[...].astype(jnp.float32)                      # (TB, K)

    m = jnp.max(x, axis=-1, keepdims=True)
    lse = jnp.log(jnp.sum(jnp.exp(x - m), axis=-1, keepdims=True)) + m

    smoothed = (1.0 - epsilon) * t + epsilon / num_classes
    # -sum(smoothed * log_probs) = sum(smoothed * (lse - x))
    loss_ref[...] = jnp.sum(smoothed * (lse - x), axis=-1, keepdims=True)


def _pick_batch_tile(batch, num_classes, itemsize, target_block_bytes):
    """Rows per block: ~target_block_bytes logits blocks, multiple of 8, <=1024."""
    rows = target_block_bytes // max(1, num_classes * itemsize)
    rows = max(8, min(1024, rows))
    rows = (rows // 8) * 8
    if batch <= rows:
        return batch  # single block; full-extent escape of the (8,128) rule
    return rows


def cross_entropy_label_smooth(logits, targets, *, epsilon=0.05, reduction=True):
    """JAX/Pallas equivalent of CrossEntropyLabelSmooth.forward."""
    batch, num_classes = logits.shape
    itemsize = jnp.dtype(logits.dtype).itemsize
    soft = targets.ndim == 2
    # Soft-target path streams two (TB, K) blocks per step -> halve the tile.
    target_block_bytes = (1 if soft else 2) * 1024 * 1024
    tb = _pick_batch_tile(batch, num_classes, itemsize, target_block_bytes)
    grid = (pl.cdiv(batch, tb),)

    compiler_params = pltpu.CompilerParams(
        dimension_semantics=("parallel",),          # megacore-friendly on v7x
        vmem_limit_bytes=48 * 1024 * 1024,          # fits v7x 64 MiB physical
    )

    logits_spec = pl.BlockSpec((tb, num_classes), lambda i: (i, 0))
    row_spec = pl.BlockSpec((tb, 1), lambda i: (i, 0))
    out_spec = pl.BlockSpec((tb, 1), lambda i: (i, 0))
    out_shape = jax.ShapeDtypeStruct((batch, 1), jnp.float32)

    if targets.ndim == 1:
        labels = targets.astype(jnp.int32).reshape(batch, 1)
        kernel = functools.partial(
            _ce_ls_int_kernel,
            epsilon=float(epsilon),
            num_classes=int(num_classes),
        )
        per_sample = pl.pallas_call(
            kernel,
            out_shape=out_shape,
            grid_spec=pl.GridSpec(
                grid=grid,
                in_specs=[logits_spec, row_spec],
                out_specs=out_spec,
            ),
            compiler_params=compiler_params,
        )(logits, labels)
    elif targets.ndim == 2:
        kernel = functools.partial(
            _ce_ls_soft_kernel,
            epsilon=float(epsilon),
            num_classes=int(num_classes),
        )
        targets_spec = pl.BlockSpec((tb, num_classes), lambda i: (i, 0))
        per_sample = pl.pallas_call(
            kernel,
            out_shape=out_shape,
            grid_spec=pl.GridSpec(
                grid=grid,
                in_specs=[logits_spec, targets_spec],
                out_specs=out_spec,
            ),
            compiler_params=compiler_params,
        )(logits, targets)
    else:
        raise ValueError("targets must be 1-D integer labels or 2-D soft targets")

    per_sample = per_sample[:, 0]                                  # (B,)
    if reduction:
        return jnp.mean(per_sample)
    return per_sample


def _reference(logits, targets, epsilon, num_classes, reduction):
    log_probs = jax.nn.log_softmax(logits.astype(jnp.float32), axis=1)
    if targets.ndim == 1:
        t = jax.nn.one_hot(targets, num_classes, dtype=jnp.float32)
    else:
        t = targets.astype(jnp.float32)
    t = (1.0 - epsilon) * t + epsilon / num_classes
    loss = jnp.sum(-t * log_probs, axis=1)
    return jnp.mean(loss) if reduction else loss


if __name__ == "__main__":
    key = jax.random.PRNGKey(0)
    k1, k2 = jax.random.split(key)

    batch, num_classes = 8, 32
    logits = jax.random.normal(k1, (batch, num_classes), dtype=jnp.float32)
    targets = jax.random.randint(k2, (batch,), 0, num_classes, dtype=jnp.int32)

    # Integer-label path, mean reduction.
    loss = jax.block_until_ready(
        cross_entropy_label_smooth(logits, targets, epsilon=0.05, reduction=True)
    )
    ref = _reference(logits, targets, 0.05, num_classes, True)
    assert jnp.allclose(loss, ref, atol=1e-5, rtol=1e-5), (loss, ref)

    # Integer-label path, per-sample losses.
    loss_ps = jax.block_until_ready(
        cross_entropy_label_smooth(logits, targets, epsilon=0.05, reduction=False)
    )
    ref_ps = _reference(logits, targets, 0.05, num_classes, False)
    assert jnp.allclose(loss_ps, ref_ps, atol=1e-5, rtol=1e-5), (loss_ps, ref_ps)

    # 2-D (soft / one-hot) targets path.
    soft_targets = jax.nn.one_hot(targets, num_classes, dtype=jnp.float32)
    loss_soft = jax.block_until_ready(
        cross_entropy_label_smooth(logits, soft_targets, epsilon=0.05, reduction=True)
    )
    ref_soft = _reference(logits, soft_targets, 0.05, num_classes, True)
    assert jnp.allclose(loss_soft, ref_soft, atol=1e-5, rtol=1e-5), (loss_soft, ref_soft)

    # bf16 logits path (native-dtype DMA, f32 compute in-kernel).
    logits_bf16 = logits.astype(jnp.bfloat16)
    loss_bf16 = jax.block_until_ready(
        cross_entropy_label_smooth(logits_bf16, targets, epsilon=0.05, reduction=True)
    )
    ref_bf16 = _reference(logits_bf16, targets, 0.05, num_classes, True)
    assert jnp.allclose(loss_bf16, ref_bf16, atol=1e-2, rtol=1e-2), (loss_bf16, ref_bf16)

    print("KERNEL_OK")
</pallas_src>

<mosaic_0001>
module attributes {stable_mosaic.version = 11 : i64} {
  func.func @_ce_ls_int_kernel(%arg0: i32, %arg1: memref<8x32xf32, #tpu.memory_space<vmem>>, %arg2: memref<8x1xi32, #tpu.memory_space<vmem>>, %arg3: memref<8x1xf32, #tpu.memory_space<vmem>>) attributes {dimension_semantics = [#tpu.dimension_semantics<parallel>], iteration_bounds = array<i64: 1>, scalar_prefetch = 0 : i64, scratch_operands = 0 : i64, tpu.core_type = #tpu.core_type<tc>, window_params = [{transform_indices = @transform_0, window_bounds = array<i64: 8, 32>}, {transform_indices = @transform_1, window_bounds = array<i64: 8, 1>}, {transform_indices = @transform_2, window_bounds = array<i64: 8, 1>}]} {
    %c0 = arith.constant 0 : index
    %c0_0 = arith.constant 0 : index
    %0 = vector.load %arg1[%c0, %c0_0] : memref<8x32xf32, #tpu.memory_space<vmem>>, vector<8x32xf32>
    %c0_1 = arith.constant 0 : index
    %c0_2 = arith.constant 0 : index
    %1 = vector.load %arg2[%c0_1, %c0_2] : memref<8x1xi32, #tpu.memory_space<vmem>>, vector<8x1xi32>
    %cst = arith.constant dense<0xFF800000> : vector<8xf32>
    %2 = vector.multi_reduction <maximumf>, %0, %cst [1] : vector<8x32xf32> to vector<8xf32>
    %3 = vector.shape_cast %2 : vector<8xf32> to vector<8x1xf32>
    %4 = vector.broadcast %3 : vector<8x1xf32> to vector<8x32xf32>
    %5 = arith.subf %0, %4 : vector<8x32xf32>
    %6 = math.exp %5 : vector<8x32xf32>
    %cst_3 = arith.constant dense<0.000000e+00> : vector<8xf32>
    %7 = vector.multi_reduction <add>, %6, %cst_3 [1] : vector<8x32xf32> to vector<8xf32>
    %8 = vector.shape_cast %7 : vector<8xf32> to vector<8x1xf32>
    %9 = math.log %8 : vector<8x1xf32>
    %10 = arith.addf %9, %3 : vector<8x1xf32>
    %11 = tpu.iota {dimensions = array<i32: 1>} : vector<8x32xi32>
    %12 = vector.broadcast %1 : vector<8x1xi32> to vector<8x32xi32>
    %13 = arith.cmpi eq, %11, %12 : vector<8x32xi32>
    %cst_4 = arith.constant 0.951562523 : f32
    %cst_5 = arith.constant 1.562500e-03 : f32
    %14 = vector.broadcast %cst_4 : f32 to vector<8x32xf32>
    %15 = vector.broadcast %cst_5 : f32 to vector<8x32xf32>
    %16 = arith.select %13, %14, %15 : vector<8x32xi1>, vector<8x32xf32>
    %17 = arith.mulf %16, %0 : vector<8x32xf32>
    %cst_6 = arith.constant dense<0.000000e+00> : vector<8xf32>
    %18 = vector.multi_reduction <add>, %17, %cst_6 [1] : vector<8x32xf32> to vector<8xf32>
    %19 = vector.shape_cast %18 : vector<8xf32> to vector<8x1xf32>
    %20 = arith.subf %10, %19 : vector<8x1xf32>
    %c0_7 = arith.constant 0 : index
    %c0_8 = arith.constant 0 : index
    %21 = vector.load %arg3[%c0_7, %c0_8] : memref<8x1xf32, #tpu.memory_space<vmem>>, vector<8x1xf32>
    tpu.vector_store %arg3[%c0_7, %c0_8], %20 {strides = array<i32>} : memref<8x1xf32, #tpu.memory_space<vmem>>, vector<8x1xf32>,
    return
  }
  func.func @transform_0(%arg0: i32) -> (i32, i32) {
    %c0_i32 = arith.constant 0 : i32
    %c0_i32_0 = arith.constant 0 : i32
    return %arg0, %c0_i32 : i32, i32
  }
  func.func @transform_1(%arg0: i32) -> (i32, i32) {
    %c0_i32 = arith.constant 0 : i32
    %c0_i32_0 = arith.constant 0 : i32
    return %arg0, %c0_i32 : i32, i32
  }
  func.func @transform_2(%arg0: i32) -> (i32, i32) {
    %c0_i32 = arith.constant 0 : i32
    %c0_i32_0 = arith.constant 0 : i32
    return %arg0, %c0_i32 : i32, i32
  }
}

</mosaic_0001>

<llo_original>
// kernel: tpu_custom_call.1
$region0: #{tpu_custom_call.1}
  #allocation0 [shape = 'u32[]', space=smem, size = 0x4, offset = 0x4, fixed_abs, tag = 'smem constant byte address 0x4 - core index']
  #allocation1 [shape = 'u32[144,128]{1,0:T(1,128)}', space=vmem, size = 0x12000, scoped, tag = 'internal scratch']
  %s0 = inlined_call_operand.vmem [shape: f32[8,32], index: 0, kind: input, shape index: {}]
  %s1 = inlined_call_operand.vmem [shape: s32[8,1], index: 1, kind: input, shape index: {}]
  %s2 = inlined_call_operand.vmem [shape: f32[8,1], index: 2, kind: output, shape index: {}]
  %s3 = sld [smem:[#allocation0]]
  $region18: #{tpu_custom_call.1} parent=0
    _
  %s5 = ssub.s32 1, %s3
  %s6 = scalar_select 0, %s5, %s3
  // Predicated region
  $region2: #{tpu_custom_call.1} parent=0 // pred_check
    _
  $region3: #{tpu_custom_call.1} parent=0 // pred_check_branch
    %8 = sbr.rel (0) target = $region5
  $region4: #{tpu_custom_call.1} parent=0 // pred_region
    _
  $region5: #{tpu_custom_call.1} parent=0 // pred_fallthru
    _
  // Predicated region
  $region6: #{tpu_custom_call.1} parent=0 // pred_check
    _
  $region7: #{tpu_custom_call.1} parent=0 // pred_check_branch
    %10 = sbr.rel (0) target = $region9
  $region8: #{tpu_custom_call.1} parent=0 // pred_region
    _
  $region9: #{tpu_custom_call.1} parent=0 // pred_fallthru
    _
  %v11 = vld [vmem:[%s0] sm:$0xff]
  %v12 = vld [vmem:[%s1] sm:$0xff]
  %vm13 = vcmask 261120
  %v14 = vsel %vm13, %v11, -inf
  %15 = vmax.xlane.f32.xlu0 %v14
  %v16 = vpop.xlane.xlu0 %15
  %v17 = vsub.f32 %v11, %v16
  %v18 = vmul.f32 %v17, 1.442695
  %v19 = vpow.pop %v18
  %v20 = vsel %vm13, %v19, 0.0
  %21 = vadd.xlane.f32.xlu0 %v20
  %v22 = vpop.xlane.xlu0 %21
  %v23 = vlog2.pop %v22
  %v24 = vmul.f32 %v23, 0.6931472
  %v25 = vadd.f32 %v24, %v16
  %v26 = vlaneseq
  %v27 = vand.u32 %v26, 127
  %28 = vset.pattern.permute.xlu0 0
  %29 = vperm.xlu0 %28, %v12
  %v30 = vpop.permute.xlu0 %29
  %vm31 = vcmp.eq.s32.totalorder %v27, %v30
  %v32 = vsel %vm31, 0.9515625, 0.0015625
  %v33 = vmul.f32 %v32, %v11
  %v34 = vsel %vm13, %v33, 0.0
  %35 = vadd.xlane.f32.xlu0 %v34
  %v36 = vpop.xlane.xlu0 %35
  %v37 = vsub.f32 %v25, %v36
  %vm38 = vcmask 7168
  %39 = vst.msk [vmem:[%s2] sm:$0xff] %vm38, %v37
  // Predicated region
  $region10: #{tpu_custom_call.1} parent=0 // pred_check
    _
  $region11: #{tpu_custom_call.1} parent=0 // pred_check_branch
    %41 = sbr.rel (0) target = $region13
  $region12: #{tpu_custom_call.1} parent=0 // pred_region
    _
  $region13: #{tpu_custom_call.1} parent=0 // pred_fallthru
    _
  // Predicated region
  $region14: #{tpu_custom_call.1} parent=0 // pred_check
    _
  $region15: #{tpu_custom_call.1} parent=0 // pred_check_branch
    %43 = sbr.rel (0) target = $region17
  $region16: #{tpu_custom_call.1} parent=0 // pred_region
    _
  $region17: #{tpu_custom_call.1} parent=0 // pred_fallthru
    _

</llo_original>
